<compile_context>
chip_gen: v5e
topology: v5e:2x2
jax: 0.10.0
libtpu: 0.0.40
codegen_flags: <defaults>
</compile_context>

<pallas_src>
import jax
import jax.numpy as jnp
from jax.experimental import pallas as pl
from jax.experimental.pallas import tpu as pltpu


def _decoder_kernel(x_ref, rzb_ref, w1xT_ref, w2T_ref, b2_ref,
                    wmuT_ref, bmu_ref, wvarT_ref, bvar_ref,
                    mu_ref, var_ref):
    x = x_ref[0]                                  # [x_dim, TN]  bf16
    rzb = rzb_ref[0]                              # [H, 1]       f32  ([r|z] @ w1_rz + b1)

    # layer 1: w1x^T @ x + rz_bias, ReLU          -> [H, TN]
    a1 = jnp.dot(w1xT_ref[...], x, preferred_element_type=jnp.float32) + rzb
    a1 = jnp.maximum(a1, 0.0)

    # layer 2: w2^T @ a1 + b2, ReLU               -> [H, TN]
    a2 = jnp.dot(w2T_ref[...], a1.astype(jnp.bfloat16),
                 preferred_element_type=jnp.float32) + b2_ref[...]
    a2 = jnp.maximum(a2, 0.0)
    a2b = a2.astype(jnp.bfloat16)

    # heads: mu and var as separate small matmuls -> [y_dim, TN]
    mu = jnp.dot(wmuT_ref[...], a2b, preferred_element_type=jnp.float32) + bmu_ref[...]
    vpre = jnp.dot(wvarT_ref[...], a2b, preferred_element_type=jnp.float32) + bvar_ref[...]

    mu_ref[0] = mu.astype(mu_ref.dtype)
    # stable softplus only on the var head
    var_ref[0] = jnp.logaddexp(vpre, 0.0).astype(var_ref.dtype)


def decoder_forward(x, r, z, params, *, max_row_tile=4096):
    """x: [B, N, x_dim], r: [B, r_dim], z: [B, z_dim] -> (mu, var): [B, N, y_dim]."""
    B, N, x_dim = x.shape
    hidden = params["w1"].shape[-1]
    y_dim = params["w_mu"].shape[-1]

    # ---- wrapper-side prep (tiny tensors; avoids materializing [x|r|z]) ----
    w1 = params["w1"].astype(jnp.float32)                      # [x_dim + r_dim + z_dim, H]
    w1xT = w1[:x_dim].T.astype(jnp.bfloat16)                   # [H, x_dim]
    w1_rz = w1[x_dim:]                                         # [r_dim + z_dim, H], f32
    rz = jnp.concatenate([r, z], axis=-1).astype(jnp.float32)  # [B, r_dim + z_dim]
    rz_bias = (rz @ w1_rz + params["b1"]).astype(jnp.float32)  # [B, H]
    rz_bias = rz_bias.reshape(B, hidden, 1)                    # [B, H, 1]

    w2T = params["w2"].T.astype(jnp.bfloat16)                  # [H, H]
    b2 = params["b2"].astype(jnp.float32).reshape(hidden, 1)   # [H, 1]
    wmuT = params["w_mu"].T.astype(jnp.bfloat16)               # [y_dim, H]
    bmu = params["b_mu"].astype(jnp.float32).reshape(y_dim, 1)
    wvarT = params["w_var"].T.astype(jnp.bfloat16)             # [y_dim, H]
    bvar = params["b_var"].astype(jnp.float32).reshape(y_dim, 1)

    # Points-on-lanes layout: transpose + bf16 cast in one fused XLA pass.
    x_t = jnp.swapaxes(x, 1, 2).astype(jnp.bfloat16)           # [B, x_dim, N]

    # ---- row tile along num_points (lane axis) ----
    if N <= max_row_tile:
        TN = N
        if B == 1 and N >= 256:
            # v7x megacore: guarantee >= 2 grid steps when there is only 1 batch row.
            TN = 128 * ((N + 255) // 256)
    else:
        TN = max(128, (max_row_tile // 128) * 128)             # lane-aligned tile
    grid = (B, pl.cdiv(N, TN))

    x_spec = pl.BlockSpec((1, x_dim, TN), lambda b, j: (b, 0, j))
    rzb_spec = pl.BlockSpec((1, hidden, 1), lambda b, j: (b, 0, 0))
    w1xT_spec = pl.BlockSpec((hidden, x_dim), lambda b, j: (0, 0))
    w2T_spec = pl.BlockSpec((hidden, hidden), lambda b, j: (0, 0))
    b2_spec = pl.BlockSpec((hidden, 1), lambda b, j: (0, 0))
    wmuT_spec = pl.BlockSpec((y_dim, hidden), lambda b, j: (0, 0))
    bmu_spec = pl.BlockSpec((y_dim, 1), lambda b, j: (0, 0))
    wvarT_spec = pl.BlockSpec((y_dim, hidden), lambda b, j: (0, 0))
    bvar_spec = pl.BlockSpec((y_dim, 1), lambda b, j: (0, 0))
    out_spec = pl.BlockSpec((1, y_dim, TN), lambda b, j: (b, 0, j))

    rows = B * N
    flops = 2 * rows * (x_dim * hidden + hidden * hidden + hidden * 2 * y_dim)
    bytes_accessed = (
        x_t.size * 2                                            # streamed bf16 x
        + rz_bias.size * 4                                      # per-batch layer-1 bias
        + (w1xT.size + w2T.size + wmuT.size + wvarT.size) * 2   # bf16 weights
        + (b2.size + bmu.size + bvar.size) * 4
        + 2 * rows * y_dim * 4                                  # mu + var outputs
    )
    cost = pl.CostEstimate(flops=flops,
                           transcendentals=2 * rows * y_dim,    # exp + log, var half only
                           bytes_accessed=bytes_accessed)

    mu_t, var_t = pl.pallas_call(
        _decoder_kernel,
        out_shape=(jax.ShapeDtypeStruct((B, y_dim, N), jnp.float32),
                   jax.ShapeDtypeStruct((B, y_dim, N), jnp.float32)),
        grid=grid,
        in_specs=[x_spec, rzb_spec, w1xT_spec, w2T_spec, b2_spec,
                  wmuT_spec, bmu_spec, wvarT_spec, bvar_spec],
        out_specs=[out_spec, out_spec],
        compiler_params=pltpu.CompilerParams(
            dimension_semantics=("parallel", "parallel")),
        cost_estimate=cost,
    )(x_t, rz_bias, w1xT, w2T, b2, wmuT, bmu, wvarT, bvar)

    # Back to the module's [B, N, y_dim] layout (skip if the consumer accepts [B, y_dim, N]).
    mu = jnp.swapaxes(mu_t, 1, 2)
    var = jnp.swapaxes(var_t, 1, 2)
    return mu, var


def init_params(key, x_dim, y_dim, r_dim, z_dim, hidden=64):
    """Deterministic parameter init (shapes match the PyTorch module)."""
    d_in = x_dim + r_dim + z_dim
    ks = jax.random.split(key, 8)
    scale = 0.1
    return {
        "w1":    scale * jax.random.normal(ks[0], (d_in, hidden), jnp.float32),
        "b1":    scale * jax.random.normal(ks[1], (1, hidden), jnp.float32),
        "w2":    scale * jax.random.normal(ks[2], (hidden, hidden), jnp.float32),
        "b2":    scale * jax.random.normal(ks[3], (1, hidden), jnp.float32),
        "w_mu":  scale * jax.random.normal(ks[4], (hidden, y_dim), jnp.float32),
        "b_mu":  scale * jax.random.normal(ks[5], (1, y_dim), jnp.float32),
        "w_var": scale * jax.random.normal(ks[6], (hidden, y_dim), jnp.float32),
        "b_var": scale * jax.random.normal(ks[7], (1, y_dim), jnp.float32),
    }


def _reference(x, r, z, params):
    """Pure-JAX f32 reference matching the PyTorch module semantics."""
    B, N, _ = x.shape
    r_rep = jnp.broadcast_to(r[:, None, :], (B, N, r.shape[-1]))
    z_rep = jnp.broadcast_to(z[:, None, :], (B, N, z.shape[-1]))
    h = jnp.concatenate([x, r_rep, z_rep], axis=-1)
    h = jax.nn.relu(h @ params["w1"] + params["b1"][0])
    h = jax.nn.relu(h @ params["w2"] + params["b2"][0])
    mu = h @ params["w_mu"] + params["b_mu"][0]
    var = jax.nn.softplus(h @ params["w_var"] + params["b_var"][0])
    return mu, var


if __name__ == "__main__":
    # Small shapes consistent with the module's forward signature.
    batch, num_points = 2, 8
    x_dim, y_dim, r_dim, z_dim = 3, 2, 16, 16

    key = jax.random.PRNGKey(0)
    kx, kr, kz, kp = jax.random.split(key, 4)
    x = jax.random.normal(kx, (batch, num_points, x_dim), jnp.float32)
    r = jax.random.normal(kr, (batch, r_dim), jnp.float32)
    z = jax.random.normal(kz, (batch, z_dim), jnp.float32)
    params = init_params(kp, x_dim, y_dim, r_dim, z_dim)

    mu, var = decoder_forward(x, r, z, params)
    jax.block_until_ready((mu, var))

    mu_ref, var_ref = _reference(x, r, z, params)
    assert mu.shape == (batch, num_points, y_dim)
    assert var.shape == (batch, num_points, y_dim)
    # bf16 MXU operands (f32 accumulation) -> compare to f32 reference at bf16 tolerance.
    assert jnp.allclose(mu, mu_ref, atol=3e-2, rtol=3e-2)
    assert jnp.allclose(var, var_ref, atol=3e-2, rtol=3e-2)
    assert bool(jnp.all(var > 0.0))

    print("KERNEL_OK")
</pallas_src>

<mosaic_0001>
module attributes {stable_mosaic.version = 11 : i64} {
  func.func @_decoder_kernel(%arg0: i32, %arg1: i32, %arg2: memref<1x3x8xbf16, #tpu.memory_space<vmem>>, %arg3: memref<1x64x1xf32, #tpu.memory_space<vmem>>, %arg4: memref<64x3xbf16, #tpu.memory_space<vmem>>, %arg5: memref<64x64xbf16, #tpu.memory_space<vmem>>, %arg6: memref<64x1xf32, #tpu.memory_space<vmem>>, %arg7: memref<2x64xbf16, #tpu.memory_space<vmem>>, %arg8: memref<2x1xf32, #tpu.memory_space<vmem>>, %arg9: memref<2x64xbf16, #tpu.memory_space<vmem>>, %arg10: memref<2x1xf32, #tpu.memory_space<vmem>>, %arg11: memref<1x2x8xf32, #tpu.memory_space<vmem>>, %arg12: memref<1x2x8xf32, #tpu.memory_space<vmem>>) attributes {dimension_semantics = [#tpu.dimension_semantics<parallel>, #tpu.dimension_semantics<parallel>], iteration_bounds = array<i64: 2, 1>, scalar_prefetch = 0 : i64, scratch_operands = 0 : i64, tpu.core_type = #tpu.core_type<tc>, window_params = [{transform_indices = @transform_0, window_bounds = array<i64: 1, 3, 8>}, {transform_indices = @transform_1, window_bounds = array<i64: 1, 64, 1>}, {pipeline_mode = #tpu.pipeline_mode<synchronous>, transform_indices = @transform_2, window_bounds = array<i64: 64, 3>}, {pipeline_mode = #tpu.pipeline_mode<synchronous>, transform_indices = @transform_3, window_bounds = array<i64: 64, 64>}, {pipeline_mode = #tpu.pipeline_mode<synchronous>, transform_indices = @transform_4, window_bounds = array<i64: 64, 1>}, {pipeline_mode = #tpu.pipeline_mode<synchronous>, transform_indices = @transform_5, window_bounds = array<i64: 2, 64>}, {pipeline_mode = #tpu.pipeline_mode<synchronous>, transform_indices = @transform_6, window_bounds = array<i64: 2, 1>}, {pipeline_mode = #tpu.pipeline_mode<synchronous>, transform_indices = @transform_7, window_bounds = array<i64: 2, 64>}, {pipeline_mode = #tpu.pipeline_mode<synchronous>, transform_indices = @transform_8, window_bounds = array<i64: 2, 1>}, {transform_indices = @transform_9, window_bounds = array<i64: 1, 2, 8>}, {transform_indices = @transform_10, window_bounds = array<i64: 1, 2, 8>}]} {
    %c0 = arith.constant 0 : index
    %c0_0 = arith.constant 0 : index
    %c0_1 = arith.constant 0 : index
    %0 = vector.load %arg2[%c0, %c0_0, %c0_1] : memref<1x3x8xbf16, #tpu.memory_space<vmem>>, vector<1x3x8xbf16>
    %1 = vector.shape_cast %0 : vector<1x3x8xbf16> to vector<3x8xbf16>
    %c0_2 = arith.constant 0 : index
    %c0_3 = arith.constant 0 : index
    %c0_4 = arith.constant 0 : index
    %2 = vector.load %arg3[%c0_2, %c0_3, %c0_4] : memref<1x64x1xf32, #tpu.memory_space<vmem>>, vector<1x64x1xf32>
    %3 = vector.shape_cast %2 : vector<1x64x1xf32> to vector<64x1xf32>
    %c0_5 = arith.constant 0 : index
    %c0_6 = arith.constant 0 : index
    %4 = vector.load %arg4[%c0_5, %c0_6] : memref<64x3xbf16, #tpu.memory_space<vmem>>, vector<64x3xbf16>
    %cst = arith.constant dense<0.000000e+00> : vector<64x8xf32>
    %5 = tpu.matmul %4, %1, %cst {dimension_numbers = #tpu.dot_dimension_numbers<[1], [0], [0], [1], [0, 0, 1, 1], [], []>} : vector<64x3xbf16>, vector<3x8xbf16>, vector<64x8xf32> -> vector<64x8xf32>
    %6 = vector.broadcast %3 : vector<64x1xf32> to vector<64x8xf32>
    %7 = arith.addf %5, %6 : vector<64x8xf32>
    %cst_7 = arith.constant 0.000000e+00 : f32
    %8 = vector.broadcast %cst_7 : f32 to vector<64x8xf32>
    %9 = arith.maximumf %7, %8 : vector<64x8xf32>
    %c0_8 = arith.constant 0 : index
    %c0_9 = arith.constant 0 : index
    %10 = vector.load %arg5[%c0_8, %c0_9] : memref<64x64xbf16, #tpu.memory_space<vmem>>, vector<64x64xbf16>
    %11 = arith.truncf %9 : vector<64x8xf32> to vector<64x8xbf16>
    %cst_10 = arith.constant dense<0.000000e+00> : vector<64x8xf32>
    %12 = tpu.matmul %10, %11, %cst_10 {dimension_numbers = #tpu.dot_dimension_numbers<[1], [0], [0], [1], [0, 0, 1, 1], [], []>} : vector<64x64xbf16>, vector<64x8xbf16>, vector<64x8xf32> -> vector<64x8xf32>
    %c0_11 = arith.constant 0 : index
    %c0_12 = arith.constant 0 : index
    %13 = vector.load %arg6[%c0_11, %c0_12] : memref<64x1xf32, #tpu.memory_space<vmem>>, vector<64x1xf32>
    %14 = vector.broadcast %13 : vector<64x1xf32> to vector<64x8xf32>
    %15 = arith.addf %12, %14 : vector<64x8xf32>
    %cst_13 = arith.constant 0.000000e+00 : f32
    %16 = vector.broadcast %cst_13 : f32 to vector<64x8xf32>
    %17 = arith.maximumf %15, %16 : vector<64x8xf32>
    %18 = arith.truncf %17 : vector<64x8xf32> to vector<64x8xbf16>
    %c0_14 = arith.constant 0 : index
    %c0_15 = arith.constant 0 : index
    %19 = vector.load %arg7[%c0_14, %c0_15] : memref<2x64xbf16, #tpu.memory_space<vmem>>, vector<2x64xbf16>
    %cst_16 = arith.constant dense<0.000000e+00> : vector<2x8xf32>
    %20 = tpu.matmul %19, %18, %cst_16 {dimension_numbers = #tpu.dot_dimension_numbers<[1], [0], [0], [1], [0, 0, 1, 1], [], []>} : vector<2x64xbf16>, vector<64x8xbf16>, vector<2x8xf32> -> vector<2x8xf32>
    %c0_17 = arith.constant 0 : index
    %c0_18 = arith.constant 0 : index
    %21 = vector.load %arg8[%c0_17, %c0_18] : memref<2x1xf32, #tpu.memory_space<vmem>>, vector<2x1xf32>
    %22 = vector.broadcast %21 : vector<2x1xf32> to vector<2x8xf32>
    %23 = arith.addf %20, %22 : vector<2x8xf32>
    %c0_19 = arith.constant 0 : index
    %c0_20 = arith.constant 0 : index
    %24 = vector.load %arg9[%c0_19, %c0_20] : memref<2x64xbf16, #tpu.memory_space<vmem>>, vector<2x64xbf16>
    %cst_21 = arith.constant dense<0.000000e+00> : vector<2x8xf32>
    %25 = tpu.matmul %24, %18, %cst_21 {dimension_numbers = #tpu.dot_dimension_numbers<[1], [0], [0], [1], [0, 0, 1, 1], [], []>} : vector<2x64xbf16>, vector<64x8xbf16>, vector<2x8xf32> -> vector<2x8xf32>
    %c0_22 = arith.constant 0 : index
    %c0_23 = arith.constant 0 : index
    %26 = vector.load %arg10[%c0_22, %c0_23] : memref<2x1xf32, #tpu.memory_space<vmem>>, vector<2x1xf32>
    %27 = vector.broadcast %26 : vector<2x1xf32> to vector<2x8xf32>
    %28 = arith.addf %25, %27 : vector<2x8xf32>
    %c0_24 = arith.constant 0 : index
    %c0_25 = arith.constant 0 : index
    %c0_26 = arith.constant 0 : index
    %29 = vector.load %arg11[%c0_24, %c0_25, %c0_26] : memref<1x2x8xf32, #tpu.memory_space<vmem>>, vector<1x2x8xf32>
    %30 = vector.shape_cast %29 : vector<1x2x8xf32> to vector<2x8xf32>
    %31 = vector.shape_cast %23 : vector<2x8xf32> to vector<1x2x8xf32>
    tpu.vector_store %arg11[%c0_24, %c0_25, %c0_26], %31 {strides = array<i32>} : memref<1x2x8xf32, #tpu.memory_space<vmem>>, vector<1x2x8xf32>,
    %cst_27 = arith.constant 0.000000e+00 : f32
    %32 = vector.broadcast %cst_27 : f32 to vector<2x8xf32>
    %33 = arith.maximumf %28, %32 : vector<2x8xf32>
    %34 = vector.broadcast %cst_27 : f32 to vector<2x8xf32>
    %35 = arith.subf %28, %34 : vector<2x8xf32>
    %36 = arith.cmpf one, %35, %35 : vector<2x8xf32>
    %37 = vector.broadcast %cst_27 : f32 to vector<2x8xf32>
    %38 = arith.addf %28, %37 : vector<2x8xf32>
    %39 = math.absf %35 : vector<2x8xf32>
    %cst_28 = arith.constant 0.000000e+00 : f32
    %40 = vector.broadcast %cst_28 : f32 to vector<2x8xf32>
    %41 = arith.subf %40, %39 : vector<2x8xf32>
    %42 = math.exp %41 : vector<2x8xf32>
    %43 = math.log1p %42 : vector<2x8xf32>
    %44 = arith.addf %33, %43 : vector<2x8xf32>
    %45 = arith.select %36, %38, %44 : vector<2x8xi1>, vector<2x8xf32>
    %c0_29 = arith.constant 0 : index
    %c0_30 = arith.constant 0 : index
    %c0_31 = arith.constant 0 : index
    %46 = vector.load %arg12[%c0_29, %c0_30, %c0_31] : memref<1x2x8xf32, #tpu.memory_space<vmem>>, vector<1x2x8xf32>
    %47 = vector.shape_cast %46 : vector<1x2x8xf32> to vector<2x8xf32>
    %48 = vector.shape_cast %45 : vector<2x8xf32> to vector<1x2x8xf32>
    tpu.vector_store %arg12[%c0_29, %c0_30, %c0_31], %48 {strides = array<i32>} : memref<1x2x8xf32, #tpu.memory_space<vmem>>, vector<1x2x8xf32>,
    return
  }
  func.func @transform_0(%arg0: i32, %arg1: i32) -> (i32, i32, i32) {
    %c0_i32 = arith.constant 0 : i32
    %c0_i32_0 = arith.constant 0 : i32
    return %arg0, %c0_i32, %arg1 : i32, i32, i32
  }
  func.func @transform_1(%arg0: i32, %arg1: i32) -> (i32, i32, i32) {
    %c0_i32 = arith.constant 0 : i32
    %c0_i32_0 = arith.constant 0 : i32
    %c0_i32_1 = arith.constant 0 : i32
    return %arg0, %c0_i32, %c0_i32_0 : i32, i32, i32
  }
  func.func @transform_2(%arg0: i32, %arg1: i32) -> (i32, i32) {
    %c0_i32 = arith.constant 0 : i32
    %c0_i32_0 = arith.constant 0 : i32
    %c0_i32_1 = arith.constant 0 : i32
    return %c0_i32, %c0_i32_0 : i32, i32
  }
  func.func @transform_3(%arg0: i32, %arg1: i32) -> (i32, i32) {
    %c0_i32 = arith.constant 0 : i32
    %c0_i32_0 = arith.constant 0 : i32
    %c0_i32_1 = arith.constant 0 : i32
    return %c0_i32, %c0_i32_0 : i32, i32
  }
  func.func @transform_4(%arg0: i32, %arg1: i32) -> (i32, i32) {
    %c0_i32 = arith.constant 0 : i32
    %c0_i32_0 = arith.constant 0 : i32
    %c0_i32_1 = arith.constant 0 : i32
    return %c0_i32, %c0_i32_0 : i32, i32
  }
  func.func @transform_5(%arg0: i32, %arg1: i32) -> (i32, i32) {
    %c0_i32 = arith.constant 0 : i32
    %c0_i32_0 = arith.constant 0 : i32
    %c0_i32_1 = arith.constant 0 : i32
    return %c0_i32, %c0_i32_0 : i32, i32
  }
  func.func @transform_6(%arg0: i32, %arg1: i32) -> (i32, i32) {
    %c0_i32 = arith.constant 0 : i32
    %c0_i32_0 = arith.constant 0 : i32
    %c0_i32_1 = arith.constant 0 : i32
    return %c0_i32, %c0_i32_0 : i32, i32
  }
  func.func @transform_7(%arg0: i32, %arg1: i32) -> (i32, i32) {
    %c0_i32 = arith.constant 0 : i32
    %c0_i32_0 = arith.constant 0 : i32
    %c0_i32_1 = arith.constant 0 : i32
    return %c0_i32, %c0_i32_0 : i32, i32
  }
  func.func @transform_8(%arg0: i32, %arg1: i32) -> (i32, i32) {
    %c0_i32 = arith.constant 0 : i32
    %c0_i32_0 = arith.constant 0 : i32
    %c0_i32_1 = arith.constant 0 : i32
    return %c0_i32, %c0_i32_0 : i32, i32
  }
  func.func @transform_9(%arg0: i32, %arg1: i32) -> (i32, i32, i32) {
    %c0_i32 = arith.constant 0 : i32
    %c0_i32_0 = arith.constant 0 : i32
    return %arg0, %c0_i32, %arg1 : i32, i32, i32
  }
  func.func @transform_10(%arg0: i32, %arg1: i32) -> (i32, i32, i32) {
    %c0_i32 = arith.constant 0 : i32
    %c0_i32_0 = arith.constant 0 : i32
    return %arg0, %c0_i32, %arg1 : i32, i32, i32
  }
}

</mosaic_0001>

<llo_original>
// kernel: tpu_custom_call.1
$region0: #{tpu_custom_call.1}
  #allocation0 [shape = 'u32[]', space=smem, size = 0x4, offset = 0x4, fixed_abs, tag = 'smem constant byte address 0x4 - core index']
  #allocation1 [shape = 'u32[72,128]{1,0:T(1,128)}', space=vmem, size = 0x9000, scoped, tag = 'internal scratch']
  %s0 = inlined_call_operand.vmem [shape: bf16[2,3,8], index: 0, kind: input, shape index: {}]
  %s1 = inlined_call_operand.vmem [shape: f32[2,64,1], index: 1, kind: input, shape index: {}]
  %s2 = inlined_call_operand.vmem [shape: bf16[64,3], index: 2, kind: input, shape index: {}]
  %s3 = inlined_call_operand.vmem [shape: bf16[64,64], index: 3, kind: input, shape index: {}]
  %s4 = inlined_call_operand.vmem [shape: f32[64,1], index: 4, kind: input, shape index: {}]
  %s5 = inlined_call_operand.vmem [shape: bf16[2,64], index: 5, kind: input, shape index: {}]
  %s6 = inlined_call_operand.vmem [shape: f32[2,1], index: 6, kind: input, shape index: {}]
  %s7 = inlined_call_operand.vmem [shape: bf16[2,64], index: 7, kind: input, shape index: {}]
  %s8 = inlined_call_operand.vmem [shape: f32[2,1], index: 8, kind: input, shape index: {}]
  %s9 = inlined_call_operand.hbm [shape: f32[2,2,8], index: 9, kind: output, shape index: {0}]
  %s10 = inlined_call_operand.hbm [shape: f32[2,2,8], index: 10, kind: output, shape index: {1}]
  %11 = xla_tuple %s9, %s10
  %s12 = sld [smem:[#allocation0]]
  $region77: #{tpu_custom_call.1} parent=0
    _
  %s14 = ssub.s32 1, %s12
  %s15 = scalar_select 0, %s14, %s12
  $region1: #{tpu_custom_call.1} parent=0
    #allocation2 [shape = 'u8[2048]{0}', space=vmem, size = 0x800, scoped, tag = 'output window, operand 0']
    #allocation3 [shape = 's32[2]{0}', space=sflag, size = 0x8, scoped, tag = 'scoped memory for tpu_custom_call.1']
    #allocation4 [shape = 'u8[2048]{0}', space=vmem, size = 0x800, scoped, tag = 'output window, operand 1']
    #allocation5 [shape = 's32[2]{0}', space=sflag, size = 0x8, scoped, tag = 'scoped memory for tpu_custom_call.1']
    %16 = vsyncpa [#allocation3], 0
    %s17 = scalar_lea.sflag [#allocation3], 1
    %18 = vsyncpa %s17, 0
    %19 = vsyncpa [#allocation5], 0
    %s20 = scalar_lea.sflag [#allocation5], 1
    %21 = vsyncpa %s20, 0
    loop: start=0, step=1, limit=4
    $region2: #{tpu_custom_call.1} parent=1 // loop_pre_header
      _
    $region3: #{tpu_custom_call.1} parent=1 // loop_header
      %s23 = sphi 0, %s27
      %p24 = scmp.ge.s32.totalorder %s23, 4
      %s30 = sphi 0, %s42
      %s31 = sphi 0, %s38
      %s32 = sphi 0, %s30
      %s33 = sphi 0, %s31
      %s34 = sphi 0, %s32
      %s35 = sphi 0, %s33
      %s47 = sphi 0, %s49
      %s50 = sphi 0, %s47
      %s51 = sphi 0, %s50
      %s67 = sphi 0, %s51
      %s73 = sphi 0, %s75
      %s76 = sphi 0, %s73
      %s77 = sphi 0, %s76
      %s93 = sphi 0, %s77
      %s97 = sphi 0, %s97
      %s99 = sphi 0, %s97
      %s100 = sphi 0, %s99
      %s114 = sphi 0, %s100
      %s118 = sphi 0, %s118
      %s120 = sphi 0, %s118
      %s121 = sphi 0, %s120
      %s135 = sphi 0, %s121
      %s139 = sphi 0, %s139
      %s141 = sphi 0, %s139
      %s142 = sphi 0, %s141
      %s156 = sphi 0, %s142
      %s160 = sphi 0, %s160
      %s162 = sphi 0, %s160
      %s163 = sphi 0, %s162
      %s177 = sphi 0, %s163
      %s181 = sphi 0, %s181
      %s183 = sphi 0, %s181
      %s184 = sphi 0, %s183
      %s198 = sphi 0, %s184
      %s202 = sphi 0, %s202
      %s204 = sphi 0, %s202
      %s205 = sphi 0, %s204
      %s219 = sphi 0, %s205
      %s223 = sphi 0, %s223
      %s225 = sphi 0, %s223
      %s226 = sphi 0, %s225
      %s240 = sphi 0, %s226
      %s248 = sphi 0, %s250
      %s251 = sphi 0, %s248
      %s252 = sphi 0, %s251
      %s268 = sphi 0, %s252
      %s276 = sphi 0, %s278
      %s279 = sphi 0, %s276
      %s280 = sphi 0, %s279
      %s296 = sphi 0, %s280
    $region4: #{tpu_custom_call.1} parent=1 // loop_header_branch
      %26 = sbr.rel (%p24) target = $region8
    $region5: #{tpu_custom_call.1} parent=1 // loop_body
      %s28 = ssub.s32 %s23, 1
      %s29 = ssub.s32 %s23, 2
      %s36 = sadd.s32 1, %s31
      %p37 = scmp.ge.s32.totalorder %s36, 1
      %s38 = scalar_select %p37, 0, %s36
      %s39 = sadd.s32 1, %s30
      %s40 = scalar_select %p37, %s39, %s30
      %p41 = scmp.ge.s32.totalorder %s40, 2
      %s42 = scalar_select %p41, 0, %s40
      %s43 = ssub.s32 %s30, %s42
      %s44 = ssub.s32 %s31, %s38
      %s45 = sor.u32 %s43, %s44
      %p46 = scmp.eq.s32.totalorder %s45, 0
      %s48 = sadd.s32 %s47, 1
      %s49 = scalar_select %p46, %s47, %s48
      %p52 = pneg %p46
      %p53 = scmp.eq.s32.totalorder %s23, 1
      %p54 = por %p52, %p53
      %p55 = scmp.ne.s32.totalorder %s47, %s50
      %p56 = scmp.eq.s32.totalorder %s23, 0
      %p57 = por %p55, %p56
      %p58 = scmp.ne.s32.totalorder %s47, %s50
      %p59 = scmp.eq.s32.totalorder %s28, 1
      %p60 = por %p58, %p59
      %p61 = scmp.ne.s32.totalorder %s50, %s51
      %p62 = scmp.eq.s32.totalorder %s28, 0
      %p63 = por %p61, %p62
      %p64 = scmp.ne.s32.totalorder %s50, %s51
      %p65 = scmp.eq.s32.totalorder %s29, 1
      %p66 = por %p64, %p65
      %p68 = scmp.ne.s32.totalorder %s51, %s67
      %p69 = scmp.eq.s32.totalorder %s29, 0
      %p70 = por %p68, %p69
      %s71 = ssub.s32 %s30, %s42
      %p72 = scmp.eq.s32.totalorder %s71, 0
      %s74 = sadd.s32 %s73, 1
      %s75 = scalar_select %p72, %s73, %s74
      %p78 = pneg %p72
      %p79 = scmp.eq.s32.totalorder %s23, 1
      %p80 = por %p78, %p79
      %p81 = scmp.ne.s32.totalorder %s73, %s76
      %p82 = scmp.eq.s32.totalorder %s23, 0
      %p83 = por %p81, %p82
      %p84 = scmp.ne.s32.totalorder %s73, %s76
      %p85 = scmp.eq.s32.totalorder %s28, 1
      %p86 = por %p84, %p85
      %p87 = scmp.ne.s32.totalorder %s76, %s77
      %p88 = scmp.eq.s32.totalorder %s28, 0
      %p89 = por %p87, %p88
      %p90 = scmp.ne.s32.totalorder %s76, %s77
      %p91 = scmp.eq.s32.totalorder %s29, 1
      %p92 = por %p90, %p91
      %p94 = scmp.ne.s32.totalorder %s77, %s93
      %p95 = scmp.eq.s32.totalorder %s29, 0
      %p96 = por %p94, %p95
      %s98 = sadd.s32 %s97, 1
      %p101 = scmp.eq.s32.totalorder %s23, 1
      %p102 = scmp.ne.s32.totalorder %s97, %s99
      %p103 = scmp.eq.s32.totalorder %s23, 0
      %p104 = por %p102, %p103
      %p105 = scmp.ne.s32.totalorder %s97, %s99
      %p106 = scmp.eq.s32.totalorder %s28, 1
      %p107 = por %p105, %p106
      %p108 = scmp.ne.s32.totalorder %s99, %s100
      %p109 = scmp.eq.s32.totalorder %s28, 0
      %p110 = por %p108, %p109
      %p111 = scmp.ne.s32.totalorder %s99, %s100
      %p112 = scmp.eq.s32.totalorder %s29, 1
      %p113 = por %p111, %p112
      %p115 = scmp.ne.s32.totalorder %s100, %s114
      %p116 = scmp.eq.s32.totalorder %s29, 0
      %p117 = por %p115, %p116
      %s119 = sadd.s32 %s118, 1
      %p122 = scmp.eq.s32.totalorder %s23, 1
      %p123 = scmp.ne.s32.totalorder %s118, %s120
      %p124 = scmp.eq.s32.totalorder %s23, 0
      %p125 = por %p123, %p124
      %p126 = scmp.ne.s32.totalorder %s118, %s120
      %p127 = scmp.eq.s32.totalorder %s28, 1
      %p128 = por %p126, %p127
      %p129 = scmp.ne.s32.totalorder %s120, %s121
      %p130 = scmp.eq.s32.totalorder %s28, 0
      %p131 = por %p129, %p130
      %p132 = scmp.ne.s32.totalorder %s120, %s121
      %p133 = scmp.eq.s32.totalorder %s29, 1
      %p134 = por %p132, %p133
      %p136 = scmp.ne.s32.totalorder %s121, %s135
      %p137 = scmp.eq.s32.totalorder %s29, 0
      %p138 = por %p136, %p137
      %s140 = sadd.s32 %s139, 1
      %p143 = scmp.eq.s32.totalorder %s23, 1
      %p144 = scmp.ne.s32.totalorder %s139, %s141
      %p145 = scmp.eq.s32.totalorder %s23, 0
      %p146 = por %p144, %p145
      %p147 = scmp.ne.s32.totalorder %s139, %s141
      %p148 = scmp.eq.s32.totalorder %s28, 1
      %p149 = por %p147, %p148
      %p150 = scmp.ne.s32.totalorder %s141, %s142
      %p151 = scmp.eq.s32.totalorder %s28, 0
      %p152 = por %p150, %p151
      %p153 = scmp.ne.s32.totalorder %s141, %s142
      %p154 = scmp.eq.s32.totalorder %s29, 1
      %p155 = por %p153, %p154
      %p157 = scmp.ne.s32.totalorder %s142, %s156
      %p158 = scmp.eq.s32.totalorder %s29, 0
      %p159 = por %p157, %p158
      %s161 = sadd.s32 %s160, 1
      %p164 = scmp.eq.s32.totalorder %s23, 1
      %p165 = scmp.ne.s32.totalorder %s160, %s162
      %p166 = scmp.eq.s32.totalorder %s23, 0
      %p167 = por %p165, %p166
      %p168 = scmp.ne.s32.totalorder %s160, %s162
      %p169 = scmp.eq.s32.totalorder %s28, 1
      %p170 = por %p168, %p169
      %p171 = scmp.ne.s32.totalorder %s162, %s163
      %p172 = scmp.eq.s32.totalorder %s28, 0
      %p173 = por %p171, %p172
      %p174 = scmp.ne.s32.totalorder %s162, %s163
      %p175 = scmp.eq.s32.totalorder %s29, 1
      %p176 = por %p174, %p175
      %p178 = scmp.ne.s32.totalorder %s163, %s177
      %p179 = scmp.eq.s32.totalorder %s29, 0
      %p180 = por %p178, %p179
      %s182 = sadd.s32 %s181, 1
      %p185 = scmp.eq.s32.totalorder %s23, 1
      %p186 = scmp.ne.s32.totalorder %s181, %s183
      %p187 = scmp.eq.s32.totalorder %s23, 0
      %p188 = por %p186, %p187
      %p189 = scmp.ne.s32.totalorder %s181, %s183
      %p190 = scmp.eq.s32.totalorder %s28, 1
      %p191 = por %p189, %p190
      %p192 = scmp.ne.s32.totalorder %s183, %s184
      %p193 = scmp.eq.s32.totalorder %s28, 0
      %p194 = por %p192, %p193
      %p195 = scmp.ne.s32.totalorder %s183, %s184
      %p196 = scmp.eq.s32.totalorder %s29, 1
      %p197 = por %p195, %p196
      %p199 = scmp.ne.s32.totalorder %s184, %s198
      %p200 = scmp.eq.s32.totalorder %s29, 0
      %p201 = por %p199, %p200
      %s203 = sadd.s32 %s202, 1
      %p206 = scmp.eq.s32.totalorder %s23, 1
      %p207 = scmp.ne.s32.totalorder %s202, %s204
      %p208 = scmp.eq.s32.totalorder %s23, 0
      %p209 = por %p207, %p208
      %p210 = scmp.ne.s32.totalorder %s202, %s204
      %p211 = scmp.eq.s32.totalorder %s28, 1
      %p212 = por %p210, %p211
      %p213 = scmp.ne.s32.totalorder %s204, %s205
      %p214 = scmp.eq.s32.totalorder %s28, 0
      %p215 = por %p213, %p214
      %p216 = scmp.ne.s32.totalorder %s204, %s205
      %p217 = scmp.eq.s32.totalorder %s29, 1
      %p218 = por %p216, %p217
      %p220 = scmp.ne.s32.totalorder %s205, %s219
      %p221 = scmp.eq.s32.totalorder %s29, 0
      %p222 = por %p220, %p221
      %s224 = sadd.s32 %s223, 1
      %p227 = scmp.eq.s32.totalorder %s23, 1
      %p228 = scmp.ne.s32.totalorder %s223, %s225
      %p229 = scmp.eq.s32.totalorder %s23, 0
      %p230 = por %p228, %p229
      %p231 = scmp.ne.s32.totalorder %s223, %s225
      %p232 = scmp.eq.s32.totalorder %s28, 1
      %p233 = por %p231, %p232
      %p234 = scmp.ne.s32.totalorder %s225, %s226
      %p235 = scmp.eq.s32.totalorder %s28, 0
      %p236 = por %p234, %p235
      %p237 = scmp.ne.s32.totalorder %s225, %s226
      %p238 = scmp.eq.s32.totalorder %s29, 1
      %p239 = por %p237, %p238
      %p241 = scmp.ne.s32.totalorder %s226, %s240
      %p242 = scmp.eq.s32.totalorder %s29, 0
      %p243 = por %p241, %p242
      %s244 = ssub.s32 %s30, %s42
      %s245 = ssub.s32 %s31, %s38
      %s246 = sor.u32 %s244, %s245
      %p247 = scmp.eq.s32.totalorder %s246, 0
      %s249 = sadd.s32 %s248, 1
      %s250 = scalar_select %p247, %s248, %s249
      %p253 = pneg %p247
      %p254 = scmp.eq.s32.totalorder %s23, 1
      %p255 = por %p253, %p254
      %p256 = scmp.ne.s32.totalorder %s248, %s251
      %p257 = scmp.eq.s32.totalorder %s23, 0
      %p258 = por %p256, %p257
      %p259 = scmp.ne.s32.totalorder %s248, %s251
      %p260 = scmp.eq.s32.totalorder %s28, 1
      %p261 = por %p259, %p260
      %p262 = scmp.ne.s32.totalorder %s251, %s252
      %p263 = scmp.eq.s32.totalorder %s28, 0
      %p264 = por %p262, %p263
      %p265 = scmp.ne.s32.totalorder %s251, %s252
      %p266 = scmp.eq.s32.totalorder %s29, 1
      %p267 = por %p265, %p266
      %p269 = scmp.ne.s32.totalorder %s252, %s268
      %p270 = scmp.eq.s32.totalorder %s29, 0
      %p271 = por %p269, %p270
      %s272 = ssub.s32 %s30, %s42
      %s273 = ssub.s32 %s31, %s38
      %s274 = sor.u32 %s272, %s273
      %p275 = scmp.eq.s32.totalorder %s274, 0
      %s277 = sadd.s32 %s276, 1
      %s278 = scalar_select %p275, %s276, %s277
      %p281 = pneg %p275
      %p282 = scmp.eq.s32.totalorder %s23, 1
      %p283 = por %p281, %p282
      %p284 = scmp.ne.s32.totalorder %s276, %s279
      %p285 = scmp.eq.s32.totalorder %s23, 0
      %p286 = por %p284, %p285
      %p287 = scmp.ne.s32.totalorder %s276, %s279
      %p288 = scmp.eq.s32.totalorder %s28, 1
      %p289 = por %p287, %p288
      %p290 = scmp.ne.s32.totalorder %s279, %s280
      %p291 = scmp.eq.s32.totalorder %s28, 0
      %p292 = por %p290, %p291
      %p293 = scmp.ne.s32.totalorder %s279, %s280
      %p294 = scmp.eq.s32.totalorder %s29, 1
      %p295 = por %p293, %p294
      %p297 = scmp.ne.s32.totalorder %s280, %s296
      %p298 = scmp.eq.s32.totalorder %s29, 0
      %p299 = por %p297, %p298
      %p300 = scmp.le.s32.totalorder 1, %s23
      %p301 = scmp.lt.s32.totalorder %s23, 3
      %p302 = pnand %p300, %p301
      %p303 = pneg %p302
      // Predicated region
      $region9: #{tpu_custom_call.1} parent=5 // pred_check
        _
      $region10: #{tpu_custom_call.1} parent=5 // pred_check_branch
        %305 = sbr.rel (%p302) target = $region12
      $region11: #{tpu_custom_call.1} parent=5 // pred_region
        %s306 = ssub.s32 %s23, 1
        // Predicated region
        $region13: #{tpu_custom_call.1} parent=11 // pred_check
          %p307 = pneg %p110
        $region14: #{tpu_custom_call.1} parent=11 // pred_check_branch
          %309 = sbr.rel (%p307) target = $region16
        $region15: #{tpu_custom_call.1} parent=11 // pred_region
          _
        $region16: #{tpu_custom_call.1} parent=11 // pred_fallthru
          _
        // Predicated region
        $region17: #{tpu_custom_call.1} parent=11 // pred_check
          %p310 = pneg %p131
        $region18: #{tpu_custom_call.1} parent=11 // pred_check_branch
          %312 = sbr.rel (%p310) target = $region20
        $region19: #{tpu_custom_call.1} parent=11 // pred_region
          _
        $region20: #{tpu_custom_call.1} parent=11 // pred_fallthru
          _
        // Predicated region
        $region21: #{tpu_custom_call.1} parent=11 // pred_check
          %p313 = pneg %p152
        $region22: #{tpu_custom_call.1} parent=11 // pred_check_branch
          %315 = sbr.rel (%p313) target = $region24
        $region23: #{tpu_custom_call.1} parent=11 // pred_region
          _
        $region24: #{tpu_custom_call.1} parent=11 // pred_fallthru
          _
        // Predicated region
        $region25: #{tpu_custom_call.1} parent=11 // pred_check
          %p316 = pneg %p173
        $region26: #{tpu_custom_call.1} parent=11 // pred_check_branch
          %318 = sbr.rel (%p316) target = $region28
        $region27: #{tpu_custom_call.1} parent=11 // pred_region
          _
        $region28: #{tpu_custom_call.1} parent=11 // pred_fallthru
          _
        // Predicated region
        $region29: #{tpu_custom_call.1} parent=11 // pred_check
          %p319 = pneg %p194
        $region30: #{tpu_custom_call.1} parent=11 // pred_check_branch
          %321 = sbr.rel (%p319) target = $region32
        $region31: #{tpu_custom_call.1} parent=11 // pred_region
          _
        $region32: #{tpu_custom_call.1} parent=11 // pred_fallthru
          _
        // Predicated region
        $region33: #{tpu_custom_call.1} parent=11 // pred_check
          %p322 = pneg %p215
        $region34: #{tpu_custom_call.1} parent=11 // pred_check_branch
          %324 = sbr.rel (%p322) target = $region36
        $region35: #{tpu_custom_call.1} parent=11 // pred_region
          _
        $region36: #{tpu_custom_call.1} parent=11 // pred_fallthru
          _
        // Predicated region
        $region37: #{tpu_custom_call.1} parent=11 // pred_check
          %p325 = pneg %p236
        $region38: #{tpu_custom_call.1} parent=11 // pred_check_branch
          %327 = sbr.rel (%p325) target = $region40
        $region39: #{tpu_custom_call.1} parent=11 // pred_region
          _
        $region40: #{tpu_custom_call.1} parent=11 // pred_fallthru
          _
      $region12: #{tpu_custom_call.1} parent=5 // pred_fallthru
        _
      %p328 = scmp.lt.s32.totalorder %s23, 2
      // Predicated region
      $region41: #{tpu_custom_call.1} parent=5 // pred_check
        %p329 = pneg %p328
      $region42: #{tpu_custom_call.1} parent=5 // pred_check_branch
        %331 = sbr.rel (%p329) target = $region44
      $region43: #{tpu_custom_call.1} parent=5 // pred_region
        // Predicated region
        $region45: #{tpu_custom_call.1} parent=43 // pred_check
          %p332 = pneg %p57
        $region46: #{tpu_custom_call.1} parent=43 // pred_check_branch
          %334 = sbr.rel (%p332) target = $region48
        $region47: #{tpu_custom_call.1} parent=43 // pred_region
          %p335 = scmp.lt.s32.totalorder %s30, 1
          %s336 = scalar_select %p335, %s30, 1
          %p337 = scmp.lt.s32.totalorder %s31, 0
          %s338 = scalar_select %p337, %s31, 0
          %s339 = sadd.s32 %s338, %s336
          %s340 = smul.addr %s339, 2
          %s341 = scalar_lea.vmem %s0, %s340
        $region48: #{tpu_custom_call.1} parent=43 // pred_fallthru
          _
        // Predicated region
        $region49: #{tpu_custom_call.1} parent=43 // pred_check
          %p342 = pneg %p83
        $region50: #{tpu_custom_call.1} parent=43 // pred_check_branch
          %344 = sbr.rel (%p342) target = $region52
        $region51: #{tpu_custom_call.1} parent=43 // pred_region
          %p345 = scmp.lt.s32.totalorder %s30, 1
          %s346 = scalar_select %p345, %s30, 1
          %s347 = smul.addr %s346, 8
          %s348 = smul.addr %s347, 8
          %s349 = scalar_lea.vmem %s1, %s348
        $region52: #{tpu_custom_call.1} parent=43 // pred_fallthru
          _
      $region44: #{tpu_custom_call.1} parent=5 // pred_fallthru
        _
      %p350 = scmp.le.s32.totalorder 1, %s23
      %p351 = scmp.lt.s32.totalorder %s23, 3
      %p352 = pnand %p350, %p351
      %p353 = pneg %p352
      // Predicated region
      $region53: #{tpu_custom_call.1} parent=5 // pred_check
        _
      $region54: #{tpu_custom_call.1} parent=5 // pred_check_branch
        %355 = sbr.rel (%p352) target = $region56
      $region55: #{tpu_custom_call.1} parent=5 // pred_region
        %s356 = ssub.s32 %s23, 1
        %p357 = scmp.lt.s32.totalorder %s32, 1
        %s358 = scalar_select %p357, %s32, 1
        %p359 = scmp.lt.s32.totalorder %s33, 0
        %s360 = scalar_select %p359, %s33, 0
        %s361 = sadd.s32 %s360, %s358
        %s362 = smul.addr %s361, 2
        %s363 = scalar_lea.vmem %s0, %s362
        %p364 = pneg %p63
        %p365 = pneg %p60
        %p366 = scmp.lt.s32.totalorder %s32, 1
        %s367 = scalar_select %p366, %s32, 1
        %s368 = smul.addr %s367, 8
        %s369 = smul.addr %s368, 8
        %s370 = scalar_lea.vmem %s1, %s369
        %p371 = pneg %p89
        %p372 = pneg %p86
        %p373 = pneg %p110
        %p374 = pneg %p107
        %p375 = pneg %p131
        %p376 = pneg %p128
        %p377 = pneg %p152
        %p378 = pneg %p149
        %p379 = pneg %p173
        %p380 = pneg %p170
        %p381 = pneg %p194
        %p382 = pneg %p191
        %p383 = pneg %p215
        %p384 = pneg %p212
        %p385 = pneg %p236
        %p386 = pneg %p233
        %p387 = pneg %p264
        %p388 = pneg %p261
        %s389 = sand.u32 %s251, 1
        %s390 = scalar_lea.sflag [#allocation3], %s389
        %s391 = sand.u32 %s251, 1
        %s392 = smul.addr %s391, 2
        %s393 = scalar_lea.vmem [#allocation2], %s392
        %p394 = pneg %p292
        %p395 = pneg %p289
        %s396 = sand.u32 %s279, 1
        %s397 = scalar_lea.sflag [#allocation5], %s396
        %s398 = sand.u32 %s279, 1
        %s399 = smul.addr %s398, 2
        %s400 = scalar_lea.vmem [#allocation4], %s399
        %p401 = scmp.lt.s32.totalorder %s32, 1
        %s402 = scalar_select %p401, %s32, 1
        %p403 = scmp.lt.s32.totalorder %s33, 0
        %s404 = scalar_select %p403, %s33, 0
        %s405 = sadd.s32 %s404, %s402
        %s406 = smul.addr %s405, 2
        %s407 = scalar_lea.vmem %s0, %s406
        %p408 = scmp.lt.s32.totalorder %s32, 1
        %s409 = scalar_select %p408, %s32, 1
        %s410 = smul.addr %s409, 8
        %s411 = smul.addr %s410, 8
        %s412 = scalar_lea.vmem %s1, %s411
        %v414 = vld [vmem:[%s407] sm:$0x3]
        %v415 = vld [vmem:[%s412] sm:$0xff]
        %v416 = vld [vmem:[%s412 + $0x8] sm:$0xff]
        %v417 = vld [vmem:[%s412 + $0x10] sm:$0xff]
        %v418 = vld [vmem:[%s412 + $0x18] sm:$0xff]
        %v419 = vld [vmem:[%s412 + $0x20] sm:$0xff]
        %v420 = vld [vmem:[%s412 + $0x28] sm:$0xff]
        %v421 = vld [vmem:[%s412 + $0x30] sm:$0xff]
        %v422 = vld [vmem:[%s412 + $0x38] sm:$0xff]
        %v423 = vld [vmem:[%s2] sm:$0xf]
        %v424 = vld [vmem:[%s2 + $0x4] sm:$0xf]
        %v425 = vld [vmem:[%s2 + $0x8] sm:$0xf]
        %v426 = vld [vmem:[%s2 + $0xc] sm:$0xf]
        %v427 = vld [vmem:[%s2 + $0x10] sm:$0xf]
        %v428 = vld [vmem:[%s2 + $0x14] sm:$0xf]
        %v429 = vld [vmem:[%s2 + $0x18] sm:$0xf]
        %v430 = vld [vmem:[%s2 + $0x1c] sm:$0xf]
        %432 = vset.pattern.permute.xlu0 0
        %433 = vperm.xlu0 %432, %v415
        %v434 = vpop.permute.xlu0 %433
        %437 = vset.pattern.permute.xlu0 0
        %438 = vperm.xlu0 %437, %v416
        %v439 = vpop.permute.xlu0 %438
        %442 = vset.pattern.permute.xlu0 0
        %443 = vperm.xlu0 %442, %v417
        %v444 = vpop.permute.xlu0 %443
        %447 = vset.pattern.permute.xlu0 0
        %448 = vperm.xlu0 %447, %v418
        %v449 = vpop.permute.xlu0 %448
        %452 = vset.pattern.permute.xlu0 0
        %453 = vperm.xlu0 %452, %v419
        %v454 = vpop.permute.xlu0 %453
        %457 = vset.pattern.permute.xlu0 0
        %458 = vperm.xlu0 %457, %v420
        %v459 = vpop.permute.xlu0 %458
        %462 = vset.pattern.permute.xlu0 0
        %463 = vperm.xlu0 %462, %v421
        %v464 = vpop.permute.xlu0 %463
        %467 = vset.pattern.permute.xlu0 0
        %468 = vperm.xlu0 %467, %v422
        %v469 = vpop.permute.xlu0 %468
        %v479 = vunpack.c.l.b16 %v423
        %v480 = vunpack.c.l.b16 %v424
        %v481 = vunpack.c.l.b16 %v425
        %v482 = vunpack.c.l.b16 %v426
        %v483 = vunpack.c.l.b16 %v427
        %v484 = vunpack.c.l.b16 %v428
        %v485 = vunpack.c.l.b16 %v429
        %v486 = vunpack.c.l.b16 %v430
        %v487 = vpack.c.b16 %v480, %v479
        %v488 = vpack.c.b16 %v482, %v481
        %v489 = vpack.c.b16 %v484, %v483
        %v490 = vpack.c.b16 %v486, %v485
        %vm491 = vcmask 23552
        %v493 = vsel %vm491, %v487, 0
        %v496 = vsel %vm491, %v488, 0
        %v499 = vsel %vm491, %v489, 0
        %v502 = vsel %vm491, %v490, 0
        %vm504 = vcmask 1040384
        %vm505 = vcmask 1041408
        %v506 = vsel %vm504, 4294967295, 65535
        %v507 = vsel %vm505, %v506, 0
        %v509 = vand.u32 %v414, %v507
        %511 = vmatpush.bf16.msra.mxu0 0
        %512 = vmatpush.bf16.msra.mxu0 0
        %513 = vmatpush.bf16.msra.mxu0 0
        %514 = vmatpush.bf16.msra.mxu0 0
        %515 = vmatpush.bf16.msra.mxu0 0
        %516 = vmatpush.bf16.msra.mxu0 0
        %517 = vmatpush.bf16.msra.mxu0 0
        %518 = vmatpush.bf16.msra.mxu0 %v509
        %519 = vmatmul.bf16.gmra.mxu0 %v493
        %v520 = vpop.f32.mrf.mxu0
        %v521 = vadd.f32 %v434, %v520
        %v522 = vpop.f32.mrf.mxu0
        %v523 = vadd.f32 %v439, %v522
        %524 = vmatmul.bf16.gmra.mxu0 %v496
        %v525 = vpop.f32.mrf.mxu0
        %v526 = vadd.f32 %v444, %v525
        %v527 = vpop.f32.mrf.mxu0
        %v528 = vadd.f32 %v449, %v527
        %529 = vmatmul.bf16.gmra.mxu0 %v499
        %v530 = vpop.f32.mrf.mxu0
        %v531 = vadd.f32 %v454, %v530
        %v532 = vpop.f32.mrf.mxu0
        %v533 = vadd.f32 %v459, %v532
        %534 = vmatmul.bf16.gmra.mxu0 %v502
        %v535 = vpop.f32.mrf.mxu0
        %v536 = vadd.f32 %v464, %v535
        %v537 = vpop.f32.mrf.mxu0
        %v538 = vadd.f32 %v469, %v537
        %539 = vdwg.mxu0
        %v540 = vmax.f32 %v521, 0.0
        %v541 = vmax.f32 %v523, 0.0
        %v542 = vmax.f32 %v526, 0.0
        %v543 = vmax.f32 %v528, 0.0
        %v544 = vmax.f32 %v531, 0.0
        %v545 = vmax.f32 %v533, 0.0
        %v546 = vmax.f32 %v536, 0.0
        %v547 = vmax.f32 %v538, 0.0
        %v548 = vld [vmem:[%s3] sm:$0xf]
        %v549 = vld [vmem:[%s3 + $0x4] sm:$0xf]
        %v550 = vld [vmem:[%s3 + $0x8] sm:$0xf]
        %v551 = vld [vmem:[%s3 + $0xc] sm:$0xf]
        %v552 = vld [vmem:[%s3 + $0x10] sm:$0xf]
        %v553 = vld [vmem:[%s3 + $0x14] sm:$0xf]
        %v554 = vld [vmem:[%s3 + $0x18] sm:$0xf]
        %v555 = vld [vmem:[%s3 + $0x1c] sm:$0xf]
        %v556 = vpack.c.bf16 %v541, %v540
        %v557 = vpack.c.bf16 %v543, %v542
        %v558 = vpack.c.bf16 %v545, %v544
        %v559 = vpack.c.bf16 %v547, %v546
        %v560 = vld [vmem:[%s4] sm:$0xff]
        %v561 = vld [vmem:[%s4 + $0x8] sm:$0xff]
        %v562 = vld [vmem:[%s4 + $0x10] sm:$0xff]
        %v563 = vld [vmem:[%s4 + $0x18] sm:$0xff]
        %v564 = vld [vmem:[%s4 + $0x20] sm:$0xff]
        %v565 = vld [vmem:[%s4 + $0x28] sm:$0xff]
        %v566 = vld [vmem:[%s4 + $0x30] sm:$0xff]
        %v567 = vld [vmem:[%s4 + $0x38] sm:$0xff]
        %569 = vset.pattern.permute.xlu0 0
        %570 = vperm.xlu0 %569, %v560
        %v571 = vpop.permute.xlu0 %570
        %574 = vset.pattern.permute.xlu0 0
        %575 = vperm.xlu0 %574, %v561
        %v576 = vpop.permute.xlu0 %575
        %579 = vset.pattern.permute.xlu0 0
        %580 = vperm.xlu0 %579, %v562
        %v581 = vpop.permute.xlu0 %580
        %584 = vset.pattern.permute.xlu0 0
        %585 = vperm.xlu0 %584, %v563
        %v586 = vpop.permute.xlu0 %585
        %589 = vset.pattern.permute.xlu0 0
        %590 = vperm.xlu0 %589, %v564
        %v591 = vpop.permute.xlu0 %590
        %594 = vset.pattern.permute.xlu0 0
        %595 = vperm.xlu0 %594, %v565
        %v596 = vpop.permute.xlu0 %595
        %599 = vset.pattern.permute.xlu0 0
        %600 = vperm.xlu0 %599, %v566
        %v601 = vpop.permute.xlu0 %600
        %604 = vset.pattern.permute.xlu0 0
        %605 = vperm.xlu0 %604, %v567
        %v606 = vpop.permute.xlu0 %605
        %v616 = vunpack.c.l.b16 %v548
        %v617 = vunpack.c.l.b16 %v549
        %v618 = vunpack.c.l.b16 %v550
        %v619 = vunpack.c.l.b16 %v551
        %v620 = vunpack.c.l.b16 %v552
        %v621 = vunpack.c.l.b16 %v553
        %v622 = vunpack.c.l.b16 %v554
        %v623 = vunpack.c.l.b16 %v555
        %v624 = vpack.c.b16 %v617, %v616
        %v625 = vpack.c.b16 %v619, %v618
        %v626 = vpack.c.b16 %v621, %v620
        %v627 = vpack.c.b16 %v623, %v622
        %vm628 = vcmask 523264
        %v630 = vsel %vm628, %v624, 0
        %v633 = vsel %vm628, %v625, 0
        %v636 = vsel %vm628, %v626, 0
        %v639 = vsel %vm628, %v627, 0
        %641 = vmatpush.bf16.msra.mxu0 0
        %642 = vmatpush.bf16.msra.mxu0 0
        %643 = vmatpush.bf16.msra.mxu0 0
        %644 = vmatpush.bf16.msra.mxu0 0
        %645 = vmatpush.bf16.msra.mxu0 %v559
        %646 = vmatpush.bf16.msra.mxu0 %v558
        %647 = vmatpush.bf16.msra.mxu0 %v557
        %648 = vmatpush.bf16.msra.mxu0 %v556
        %649 = vmatmul.bf16.gmra.mxu0 %v630
        %v650 = vpop.f32.mrf.mxu0
        %v651 = vadd.f32 %v571, %v650
        %v652 = vpop.f32.mrf.mxu0
        %v653 = vadd.f32 %v576, %v652
        %654 = vmatmul.bf16.gmra.mxu0 %v633
        %v655 = vpop.f32.mrf.mxu0
        %v656 = vadd.f32 %v581, %v655
        %v657 = vpop.f32.mrf.mxu0
        %v658 = vadd.f32 %v586, %v657
        %659 = vmatmul.bf16.gmra.mxu0 %v636
        %v660 = vpop.f32.mrf.mxu0
        %v661 = vadd.f32 %v591, %v660
        %v662 = vpop.f32.mrf.mxu0
        %v663 = vadd.f32 %v596, %v662
        %664 = vmatmul.bf16.gmra.mxu0 %v639
        %v665 = vpop.f32.mrf.mxu0
        %v666 = vadd.f32 %v601, %v665
        %v667 = vpop.f32.mrf.mxu0
        %v668 = vadd.f32 %v606, %v667
        %669 = vdwg.mxu0
        %v670 = vmax.f32 %v651, 0.0
        %v671 = vmax.f32 %v653, 0.0
        %v672 = vmax.f32 %v656, 0.0
        %v673 = vmax.f32 %v658, 0.0
        %v674 = vmax.f32 %v661, 0.0
        %v675 = vmax.f32 %v663, 0.0
        %v676 = vmax.f32 %v666, 0.0
        %v677 = vmax.f32 %v668, 0.0
        %v678 = vpack.c.bf16 %v671, %v670
        %v679 = vpack.c.bf16 %v673, %v672
        %v680 = vpack.c.bf16 %v675, %v674
        %v681 = vpack.c.bf16 %v677, %v676
        %v682 = vld [vmem:[%s5] sm:$0x1]
        %v683 = vld [vmem:[%s6] sm:$0x3]
        %685 = vset.pattern.permute.xlu0 0
        %686 = vperm.xlu0 %685, %v683
        %v687 = vpop.permute.xlu0 %686
        %v690 = vsel %vm628, %v682, 0
        %692 = vmatpush.bf16.msra.mxu0 0
        %693 = vmatpush.bf16.msra.mxu0 0
        %694 = vmatpush.bf16.msra.mxu0 0
        %695 = vmatpush.bf16.msra.mxu0 0
        %696 = vmatpush.bf16.msra.mxu0 %v681
        %697 = vmatpush.bf16.msra.mxu0 %v680
        %698 = vmatpush.bf16.msra.mxu0 %v679
        %699 = vmatpush.bf16.msra.mxu0 %v678
        %700 = vmatmul.bf16.gmra.mxu0 %v690
        %v701 = vpop.f32.mrf.mxu0
        %v702 = vadd.f32 %v687, %v701
        %v703 = vpop.f32.mrf.mxu0
        %704 = vdwg.mxu0
        %v705 = vld [vmem:[%s7] sm:$0x1]
        %v706 = vld [vmem:[%s8] sm:$0x3]
        %708 = vset.pattern.permute.xlu0 0
        %709 = vperm.xlu0 %708, %v706
        %v710 = vpop.permute.xlu0 %709
        %v713 = vsel %vm628, %v705, 0
        %715 = vmatpush.bf16.msra.mxu0 0
        %716 = vmatpush.bf16.msra.mxu0 0
        %717 = vmatpush.bf16.msra.mxu0 0
        %718 = vmatpush.bf16.msra.mxu0 0
        %719 = vmatpush.bf16.msra.mxu0 %v681
        %720 = vmatpush.bf16.msra.mxu0 %v680
        %721 = vmatpush.bf16.msra.mxu0 %v679
        %722 = vmatpush.bf16.msra.mxu0 %v678
        %723 = vmatmul.bf16.gmra.mxu0 %v713
        %v724 = vpop.f32.mrf.mxu0
        %v725 = vadd.f32 %v710, %v724
        %v726 = vpop.f32.mrf.mxu0
        %727 = vdwg.mxu0
        %vm728 = vcmask 58368
        %729 = vst.msk [vmem:[%s393] sm:$0x3] %vm728, %v702
        %v730 = vmax.f32 %v725, 0.0
        %vm731 = vcmp.ne.f32.partialorder %v725, %v725
        %v732 = vadd.f32 %v725, 0.0
        %v733 = vand.u32 2147483647, %v725
        %v734 = vsub.f32 0.0, %v733
        %v735 = vmul.f32 %v734, 1.442695
        %v736 = vpow.pop %v735
        %v737 = vadd.f32 %v736, 1.0
        %v738 = vlog2.pop %v737
        %v739 = vmul.f32 %v738, 0.6931472
        %v740 = vmul.f32 -0.5, %v736
        %v741 = vadd.f32 %v740, 1.0
        %v742 = vmul.f32 %v741, %v736
        %v743 = vand.u32 2147483647, %v736
        %vm744 = vcmp.lt.f32.partialorder %v743, 0.0004427343
        %v745 = vsel %vm744, %v742, %v739
        %v746 = vadd.f32 %v730, %v745
        %v747 = vsel %vm731, %v732, %v746
        %748 = vst.msk [vmem:[%s400] sm:$0x3] %vm728, %v747
        %s749 = sand.u32 %s251, 1
        %s750 = scalar_lea.sflag [#allocation3], %s749
        %s751 = sand.u32 %s251, 1
        %s752 = smul.addr %s751, 2
        %s753 = scalar_lea.vmem [#allocation2], %s752
        %s754 = sand.u32 %s279, 1
        %s755 = scalar_lea.sflag [#allocation5], %s754
        %s756 = sand.u32 %s279, 1
        %s757 = smul.addr %s756, 2
        %s758 = scalar_lea.vmem [#allocation4], %s757
        // Predicated region
        $region57: #{tpu_custom_call.1} parent=55 // pred_check
          %p759 = pneg %p261
        $region58: #{tpu_custom_call.1} parent=55 // pred_check_branch
          %761 = sbr.rel (%p759) target = $region60
        $region59: #{tpu_custom_call.1} parent=55 // pred_region
          %763 = vsyncadd %s750, 0
          %s764 = sadd.s32 %s33, %s32
          %s765 = smul.addr %s764, 2
          %s766 = scalar_lea.hbm %s9, %s765
          %s768 = sshll.u32 %s753, 4
          %s769 = int_to_ptr.vmem [resolvable:$true] %s768
          %s770 = sshll.u32 %s766, 4
          %s771 = int_to_ptr.hbm [resolvable:$true] %s770
          %773 = dma.vmem_to_hbm [thread:$0]  %s769, 32, %s771, %s750
        $region60: #{tpu_custom_call.1} parent=55 // pred_fallthru
          _
        // Predicated region
        $region61: #{tpu_custom_call.1} parent=55 // pred_check
          %p774 = pneg %p289
        $region62: #{tpu_custom_call.1} parent=55 // pred_check_branch
          %776 = sbr.rel (%p774) target = $region64
        $region63: #{tpu_custom_call.1} parent=55 // pred_region
          %778 = vsyncadd %s755, 0
          %s779 = sadd.s32 %s33, %s32
          %s780 = smul.addr %s779, 2
          %s781 = scalar_lea.hbm %s10, %s780
          %s783 = sshll.u32 %s758, 4
          %s784 = int_to_ptr.vmem [resolvable:$true] %s783
          %s785 = sshll.u32 %s781, 4
          %s786 = int_to_ptr.hbm [resolvable:$true] %s785
          %788 = dma.vmem_to_hbm [thread:$0]  %s784, 32, %s786, %s755
        $region64: #{tpu_custom_call.1} parent=55 // pred_fallthru
          _
      $region56: #{tpu_custom_call.1} parent=5 // pred_fallthru
        _
      %p789 = scmp.le.s32.totalorder 2, %s23
      // Predicated region
      $region65: #{tpu_custom_call.1} parent=5 // pred_check
        %p790 = pneg %p789
      $region66: #{tpu_custom_call.1} parent=5 // pred_check_branch
        %792 = sbr.rel (%p790) target = $region68
      $region67: #{tpu_custom_call.1} parent=5 // pred_region
        %s793 = ssub.s32 %s23, 2
        // Predicated region
        $region69: #{tpu_custom_call.1} parent=67 // pred_check
          %p794 = pneg %p267
        $region70: #{tpu_custom_call.1} parent=67 // pred_check_branch
          %796 = sbr.rel (%p794) target = $region72
        $region71: #{tpu_custom_call.1} parent=67 // pred_region
          %s797 = sand.u32 %s252, 1
          %s798 = scalar_lea.sflag [#allocation3], %s797
          %s799 = sand.u32 %s252, 1
          %s800 = smul.addr %s799, 2
          %s801 = scalar_lea.vmem [#allocation2], %s800
          %803 = dma.done %s798, 32
        $region72: #{tpu_custom_call.1} parent=67 // pred_fallthru
          _
        // Predicated region
        $region73: #{tpu_custom_call.1} parent=67 // pred_check
          %p804 = pneg %p295
        $region74: #{tpu_custom_call.1} parent=67 // pred_check_branch
          %806 = sbr.rel (%p804) target = $region76
        $region75: #{tpu_custom_call.1} parent=67 // pred_region
          %s807 = sand.u32 %s280, 1
          %s808 = scalar_lea.sflag [#allocation5], %s807
          %s809 = sand.u32 %s280, 1
          %s810 = smul.addr %s809, 2
          %s811 = scalar_lea.vmem [#allocation4], %s810
          %813 = dma.done %s808, 32
        $region76: #{tpu_custom_call.1} parent=67 // pred_fallthru
          _
      $region68: #{tpu_custom_call.1} parent=5 // pred_fallthru
        _
    $region6: #{tpu_custom_call.1} parent=1 // loop_footer
      %s27 = sadd.s32 1, %s23
    $region7: #{tpu_custom_call.1} parent=1 // loop_footer_branch
      %22 = sbr.rel target = $region3
    $region8: #{tpu_custom_call.1} parent=1 // loop_exit
      _
    %814 = vsyncpa [#allocation3], 1
    %s815 = scalar_lea.sflag [#allocation3], 1
    %816 = vsyncpa %s815, 1
    %817 = vsyncpa [#allocation5], 1
    %s818 = scalar_lea.sflag [#allocation5], 1
    %819 = vsyncpa %s818, 1

</llo_original>
